<compile_context>
chip_gen: v7x
topology: tpu7x:2x2x1
jax: 0.10.0
libtpu: 0.0.40
codegen_flags: <defaults>
</compile_context>

<pallas_src>
import jax
import jax.numpy as jnp
from jax.experimental import pallas as pl
from jax.experimental.pallas import tpu as pltpu

_LANE = 128


def _decoder_proj_kernel(x_ref, w_ref, b_ref, o_ref):
    # x_ref: (C_in, ts) f32   w_ref: (C_out, C_in) bf16
    # b_ref: (C_out, 1) f32   o_ref: (C_out, ts) bf16
    x_bf = x_ref[...].astype(jnp.bfloat16)                 # fused cast (VPU, free)
    acc = jnp.dot(w_ref[...], x_bf,
                  preferred_element_type=jnp.float32)      # MXU, f32 accumulate
    o_ref[...] = (acc + b_ref[...]).astype(o_ref.dtype)    # bf16 lane-dense store


def _vmem_budget():
    """(scoped-vmem limit, tile working-set budget) in bytes, generation-aware."""
    try:
        cap = pltpu.get_tpu_info().vmem_capacity_bytes     # 128 MiB v5e/v6e, 64 MiB v7x
    except Exception:
        cap = 64 * 1024 * 1024                             # conservative (v7x) fallback
    limit = min(int(cap * 0.75), 96 * 1024 * 1024)         # 96 MiB v5e/v6e, 48 MiB v7x
    return limit, int(limit * 0.85)


def _pick_spatial_tile(HW, N, C_in, C_out, x_bytes, out_bytes, tile_budget):
    """Largest lane-aligned spatial tile whose steady-state VMEM footprint fits."""
    # Per spatial column: double-buffered x + double-buffered out + f32 acc temp.
    per_col = 2 * C_in * x_bytes + 2 * C_out * out_bytes + C_out * 4
    fixed = C_out * C_in * 2 + C_out * 4                   # resident bf16 W + f32 b
    ts_max = max(_LANE, ((tile_budget - fixed) // per_col) // _LANE * _LANE)
    ts = min(ts_max, HW)
    # Keep >= ~8 grid steps when the problem allows it (v7x shards "parallel"
    # axes across 2 TCs); never shrink below 512 columns (per-step amortization).
    min_steps = 8
    while ts > 512 and N * pl.cdiv(HW, ts) < min_steps:
        ts = max(_LANE, (ts // 2) // _LANE * _LANE)
    return ts


def decoder_project(x_flat, w_t, b):
    """x_flat: (N, C_in, HW) f32, w_t: (C_out, C_in) bf16, b: (C_out, 1) f32
    -> (N, C_out, HW) bf16."""
    N, C_in, HW = x_flat.shape
    C_out = w_t.shape[0]
    x_bytes = x_flat.dtype.itemsize
    out_dtype = jnp.bfloat16
    out_bytes = 2

    vmem_limit, tile_budget = _vmem_budget()

    if HW % _LANE == 0:
        ts = _pick_spatial_tile(HW, N, C_in, C_out, x_bytes, out_bytes, tile_budget)
    else:
        # Unaligned spatial extent: a full-extent lane block is legal and avoids
        # materializing pad/slice HBM passes.
        ts = HW
        # TODO(synk): if an unaligned HW ever exceeds the VMEM budget, fall back
        # to a padded tiled path.

    grid = (N, pl.cdiv(HW, ts))

    cost = pl.CostEstimate(
        flops=2 * N * HW * C_in * C_out,
        transcendentals=0,
        bytes_accessed=(x_flat.size * x_bytes
                        + w_t.size * w_t.dtype.itemsize
                        + b.size * b.dtype.itemsize
                        + N * C_out * HW * out_bytes),
    )

    return pl.pallas_call(
        _decoder_proj_kernel,
        out_shape=jax.ShapeDtypeStruct((N, C_out, HW), out_dtype),
        grid=grid,
        in_specs=[
            # Leading size-1 batch dim squeezed -> kernel ref is 2-D (C_in, ts).
            pl.BlockSpec((None, C_in, ts), lambda n, t: (n, 0, t)),   # streamed x
            pl.BlockSpec((C_out, C_in), lambda n, t: (0, 0)),         # resident W
            pl.BlockSpec((C_out, 1), lambda n, t: (0, 0)),            # resident b
        ],
        out_specs=pl.BlockSpec((None, C_out, ts), lambda n, t: (n, 0, t)),
        compiler_params=pltpu.CompilerParams(
            dimension_semantics=("parallel", "parallel"),
            vmem_limit_bytes=vmem_limit,
        ),
        cost_estimate=cost,
    )(x_flat, w_t, b)


class BaseDecoderPallas:
    """JAX/Pallas counterpart of BaseDecoder: C_in = input_size -> C_out = decoder_channels."""

    def __init__(self, decoder_channels, input_size, key):
        self.channels = decoder_channels
        self.input_size = input_size
        k_w, k_b = jax.random.split(key)
        # 1x1 conv == per-pixel dense.  Weights stored transposed (C_out, C_in)
        # and in bf16 so the MXU sees bf16 x bf16 with f32 accumulation.
        w = (jax.random.normal(k_w, (decoder_channels, input_size), jnp.float32)
             * (1.0 / jnp.sqrt(jnp.float32(input_size))))
        self.w_t = w.astype(jnp.bfloat16)
        self.b = jax.random.normal(k_b, (decoder_channels, 1), jnp.float32) * 0.01

    def __call__(self, x_nchw):
        N, C, H, W = x_nchw.shape
        assert C == self.input_size
        # Channel-first flatten: free reshape, no transposes, no pad, no cast pass.
        x_flat = x_nchw.reshape(N, C, H * W)
        y = decoder_project(x_flat, self.w_t, self.b)       # (N, C_out, H*W) bf16
        return y.reshape(N, self.channels, H, W)             # NCHW out


if __name__ == "__main__":
    key = jax.random.PRNGKey(0)
    k_x, k_p = jax.random.split(key)

    batch, in_channels, spatial = 2, 4, 16
    decoder_channels = 32

    x = jax.random.normal(k_x, (batch, in_channels, spatial, spatial), jnp.float32)

    decoder = BaseDecoderPallas(decoder_channels, in_channels, k_p)
    y = decoder(x)
    jax.block_until_ready(y)
    assert y.shape == (batch, decoder_channels, spatial, spatial)
    assert y.dtype == jnp.bfloat16

    # Pure-JAX reference with identical bf16 rounding of the operands, compared
    # against the kernel's bf16 output.
    x_bf = x.astype(jnp.bfloat16).astype(jnp.float32)
    w_f = decoder.w_t.astype(jnp.float32)                    # (C_out, C_in)
    ref = jnp.einsum("oc,nchw->nohw", w_f, x_bf) + decoder.b.reshape(1, -1, 1, 1)
    err = jnp.max(jnp.abs(y.astype(jnp.float32) - ref))
    assert err < 5e-2, float(err)

    print("KERNEL_OK")
</pallas_src>

<mosaic_0001>
module attributes {stable_mosaic.version = 11 : i64} {
  func.func @_decoder_proj_kernel(%arg0: i32, %arg1: i32, %arg2: memref<1x4x256xf32, #tpu.memory_space<vmem>>, %arg3: memref<32x4xbf16, #tpu.memory_space<vmem>>, %arg4: memref<32x1xf32, #tpu.memory_space<vmem>>, %arg5: memref<1x32x256xbf16, #tpu.memory_space<vmem>>) attributes {dimension_semantics = [#tpu.dimension_semantics<parallel>, #tpu.dimension_semantics<parallel>], iteration_bounds = array<i64: 2, 1>, scalar_prefetch = 0 : i64, scratch_operands = 0 : i64, tpu.core_type = #tpu.core_type<tc>, window_params = [{transform_indices = @transform_0, window_bounds = array<i64: 1, 4, 256>}, {pipeline_mode = #tpu.pipeline_mode<synchronous>, transform_indices = @transform_1, window_bounds = array<i64: 32, 4>}, {pipeline_mode = #tpu.pipeline_mode<synchronous>, transform_indices = @transform_2, window_bounds = array<i64: 32, 1>}, {transform_indices = @transform_3, window_bounds = array<i64: 1, 32, 256>}]} {
    %c0 = arith.constant 0 : index
    %c0_0 = arith.constant 0 : index
    %c0_1 = arith.constant 0 : index
    %0 = vector.load %arg2[%c0, %c0_0, %c0_1] : memref<1x4x256xf32, #tpu.memory_space<vmem>>, vector<1x4x256xf32>
    %1 = vector.shape_cast %0 : vector<1x4x256xf32> to vector<4x256xf32>
    %2 = arith.truncf %1 : vector<4x256xf32> to vector<4x256xbf16>
    %c0_2 = arith.constant 0 : index
    %c0_3 = arith.constant 0 : index
    %3 = vector.load %arg3[%c0_2, %c0_3] : memref<32x4xbf16, #tpu.memory_space<vmem>>, vector<32x4xbf16>
    %cst = arith.constant dense<0.000000e+00> : vector<32x256xf32>
    %4 = tpu.matmul %3, %2, %cst {dimension_numbers = #tpu.dot_dimension_numbers<[1], [0], [0], [1], [0, 0, 1, 1], [], []>} : vector<32x4xbf16>, vector<4x256xbf16>, vector<32x256xf32> -> vector<32x256xf32>
    %c0_4 = arith.constant 0 : index
    %c0_5 = arith.constant 0 : index
    %5 = vector.load %arg4[%c0_4, %c0_5] : memref<32x1xf32, #tpu.memory_space<vmem>>, vector<32x1xf32>
    %6 = vector.broadcast %5 : vector<32x1xf32> to vector<32x256xf32>
    %7 = arith.addf %4, %6 : vector<32x256xf32>
    %8 = arith.truncf %7 : vector<32x256xf32> to vector<32x256xbf16>
    %c0_6 = arith.constant 0 : index
    %c0_7 = arith.constant 0 : index
    %c0_8 = arith.constant 0 : index
    %9 = vector.load %arg5[%c0_6, %c0_7, %c0_8] : memref<1x32x256xbf16, #tpu.memory_space<vmem>>, vector<1x32x256xbf16>
    %10 = vector.shape_cast %9 : vector<1x32x256xbf16> to vector<32x256xbf16>
    %11 = vector.shape_cast %8 : vector<32x256xbf16> to vector<1x32x256xbf16>
    tpu.vector_store %arg5[%c0_6, %c0_7, %c0_8], %11 {strides = array<i32>} : memref<1x32x256xbf16, #tpu.memory_space<vmem>>, vector<1x32x256xbf16>,
    return
  }
  func.func @transform_0(%arg0: i32, %arg1: i32) -> (i32, i32, i32) {
    %c0_i32 = arith.constant 0 : i32
    %c0_i32_0 = arith.constant 0 : i32
    return %arg0, %c0_i32, %arg1 : i32, i32, i32
  }
  func.func @transform_1(%arg0: i32, %arg1: i32) -> (i32, i32) {
    %c0_i32 = arith.constant 0 : i32
    %c0_i32_0 = arith.constant 0 : i32
    %c0_i32_1 = arith.constant 0 : i32
    return %c0_i32, %c0_i32_0 : i32, i32
  }
  func.func @transform_2(%arg0: i32, %arg1: i32) -> (i32, i32) {
    %c0_i32 = arith.constant 0 : i32
    %c0_i32_0 = arith.constant 0 : i32
    %c0_i32_1 = arith.constant 0 : i32
    return %c0_i32, %c0_i32_0 : i32, i32
  }
  func.func @transform_3(%arg0: i32, %arg1: i32) -> (i32, i32, i32) {
    %c0_i32 = arith.constant 0 : i32
    %c0_i32_0 = arith.constant 0 : i32
    return %arg0, %c0_i32, %arg1 : i32, i32, i32
  }
}

</mosaic_0001>

<llo_original>
// kernel: tpu_custom_call.1
$region0: #{tpu_custom_call.1}
  #allocation0 [shape = 'u32[]', space=smem, size = 0x4, offset = 0x4, fixed_abs, tag = 'smem constant byte address 0x4 - core index']
  #allocation1 [shape = 'u32[144,128]{1,0:T(1,128)}', space=vmem, size = 0x12000, scoped, tag = 'internal scratch']
  %s0 = inlined_call_operand.vmem [shape: f32[2,4,256], index: 0, kind: input, shape index: {}]
  %s1 = inlined_call_operand.vmem [shape: bf16[32,4], index: 1, kind: input, shape index: {}]
  %s2 = inlined_call_operand.vmem [shape: f32[32,1], index: 2, kind: input, shape index: {}]
  %s3 = inlined_call_operand.hbm [shape: bf16[2,32,256], index: 3, kind: output, shape index: {}]
  %s4 = sld [smem:[#allocation0]]
  $region45: #{tpu_custom_call.1} parent=0
    _
  %s6 = ssub.s32 1, %s4
  %s7 = scalar_select 0, %s6, %s4
  $region1: #{tpu_custom_call.1} parent=0
    #allocation2 [shape = 'u8[32768]{0}', space=vmem, size = 0x8000, scoped, tag = 'output window, operand 0']
    #allocation3 [shape = 's32[2]{0}', space=sflag, size = 0x8, scoped, tag = 'scoped memory for tpu_custom_call.1']
    %8 = vsyncpa [#allocation3], 0
    %s9 = scalar_lea.sflag [#allocation3], 1
    %10 = vsyncpa %s9, 0
    loop: start=0, step=1, limit=4
    $region2: #{tpu_custom_call.1} parent=1 // loop_pre_header
      _
    $region3: #{tpu_custom_call.1} parent=1 // loop_header
      %s12 = sphi 0, %s16
      %p13 = scmp.ge.s32.totalorder %s12, 4
      %s19 = sphi 0, %s31
      %s20 = sphi 0, %s27
      %s21 = sphi 0, %s19
      %s22 = sphi 0, %s20
      %s23 = sphi 0, %s21
      %s24 = sphi 0, %s22
      %s36 = sphi 0, %s38
      %s39 = sphi 0, %s36
      %s40 = sphi 0, %s39
      %s56 = sphi 0, %s40
      %s60 = sphi 0, %s60
      %s62 = sphi 0, %s60
      %s63 = sphi 0, %s62
      %s77 = sphi 0, %s63
      %s81 = sphi 0, %s81
      %s83 = sphi 0, %s81
      %s84 = sphi 0, %s83
      %s98 = sphi 0, %s84
      %s106 = sphi 0, %s108
      %s109 = sphi 0, %s106
      %s110 = sphi 0, %s109
      %s126 = sphi 0, %s110
    $region4: #{tpu_custom_call.1} parent=1 // loop_header_branch
      %15 = sbr.rel (%p13) target = $region8
    $region5: #{tpu_custom_call.1} parent=1 // loop_body
      %s17 = ssub.s32 %s12, 1
      %s18 = ssub.s32 %s12, 2
      %s25 = sadd.s32 1, %s20
      %p26 = scmp.ge.s32.totalorder %s25, 1
      %s27 = scalar_select %p26, 0, %s25
      %s28 = sadd.s32 1, %s19
      %s29 = scalar_select %p26, %s28, %s19
      %p30 = scmp.ge.s32.totalorder %s29, 2
      %s31 = scalar_select %p30, 0, %s29
      %s32 = ssub.s32 %s19, %s31
      %s33 = ssub.s32 %s20, %s27
      %s34 = sor.u32 %s32, %s33
      %p35 = scmp.eq.s32.totalorder %s34, 0
      %s37 = sadd.s32 %s36, 1
      %s38 = scalar_select %p35, %s36, %s37
      %p41 = pneg %p35
      %p42 = scmp.eq.s32.totalorder %s12, 1
      %p43 = por %p41, %p42
      %p44 = scmp.ne.s32.totalorder %s36, %s39
      %p45 = scmp.eq.s32.totalorder %s12, 0
      %p46 = por %p44, %p45
      %p47 = scmp.ne.s32.totalorder %s36, %s39
      %p48 = scmp.eq.s32.totalorder %s17, 1
      %p49 = por %p47, %p48
      %p50 = scmp.ne.s32.totalorder %s39, %s40
      %p51 = scmp.eq.s32.totalorder %s17, 0
      %p52 = por %p50, %p51
      %p53 = scmp.ne.s32.totalorder %s39, %s40
      %p54 = scmp.eq.s32.totalorder %s18, 1
      %p55 = por %p53, %p54
      %p57 = scmp.ne.s32.totalorder %s40, %s56
      %p58 = scmp.eq.s32.totalorder %s18, 0
      %p59 = por %p57, %p58
      %s61 = sadd.s32 %s60, 1
      %p64 = scmp.eq.s32.totalorder %s12, 1
      %p65 = scmp.ne.s32.totalorder %s60, %s62
      %p66 = scmp.eq.s32.totalorder %s12, 0
      %p67 = por %p65, %p66
      %p68 = scmp.ne.s32.totalorder %s60, %s62
      %p69 = scmp.eq.s32.totalorder %s17, 1
      %p70 = por %p68, %p69
      %p71 = scmp.ne.s32.totalorder %s62, %s63
      %p72 = scmp.eq.s32.totalorder %s17, 0
      %p73 = por %p71, %p72
      %p74 = scmp.ne.s32.totalorder %s62, %s63
      %p75 = scmp.eq.s32.totalorder %s18, 1
      %p76 = por %p74, %p75
      %p78 = scmp.ne.s32.totalorder %s63, %s77
      %p79 = scmp.eq.s32.totalorder %s18, 0
      %p80 = por %p78, %p79
      %s82 = sadd.s32 %s81, 1
      %p85 = scmp.eq.s32.totalorder %s12, 1
      %p86 = scmp.ne.s32.totalorder %s81, %s83
      %p87 = scmp.eq.s32.totalorder %s12, 0
      %p88 = por %p86, %p87
      %p89 = scmp.ne.s32.totalorder %s81, %s83
      %p90 = scmp.eq.s32.totalorder %s17, 1
      %p91 = por %p89, %p90
      %p92 = scmp.ne.s32.totalorder %s83, %s84
      %p93 = scmp.eq.s32.totalorder %s17, 0
      %p94 = por %p92, %p93
      %p95 = scmp.ne.s32.totalorder %s83, %s84
      %p96 = scmp.eq.s32.totalorder %s18, 1
      %p97 = por %p95, %p96
      %p99 = scmp.ne.s32.totalorder %s84, %s98
      %p100 = scmp.eq.s32.totalorder %s18, 0
      %p101 = por %p99, %p100
      %s102 = ssub.s32 %s19, %s31
      %s103 = ssub.s32 %s20, %s27
      %s104 = sor.u32 %s102, %s103
      %p105 = scmp.eq.s32.totalorder %s104, 0
      %s107 = sadd.s32 %s106, 1
      %s108 = scalar_select %p105, %s106, %s107
      %p111 = pneg %p105
      %p112 = scmp.eq.s32.totalorder %s12, 1
      %p113 = por %p111, %p112
      %p114 = scmp.ne.s32.totalorder %s106, %s109
      %p115 = scmp.eq.s32.totalorder %s12, 0
      %p116 = por %p114, %p115
      %p117 = scmp.ne.s32.totalorder %s106, %s109
      %p118 = scmp.eq.s32.totalorder %s17, 1
      %p119 = por %p117, %p118
      %p120 = scmp.ne.s32.totalorder %s109, %s110
      %p121 = scmp.eq.s32.totalorder %s17, 0
      %p122 = por %p120, %p121
      %p123 = scmp.ne.s32.totalorder %s109, %s110
      %p124 = scmp.eq.s32.totalorder %s18, 1
      %p125 = por %p123, %p124
      %p127 = scmp.ne.s32.totalorder %s110, %s126
      %p128 = scmp.eq.s32.totalorder %s18, 0
      %p129 = por %p127, %p128
      %p130 = scmp.le.s32.totalorder 1, %s12
      %p131 = scmp.lt.s32.totalorder %s12, 3
      %p132 = pnand %p130, %p131
      %p133 = pneg %p132
      // Predicated region
      $region9: #{tpu_custom_call.1} parent=5 // pred_check
        _
      $region10: #{tpu_custom_call.1} parent=5 // pred_check_branch
        %135 = sbr.rel (%p132) target = $region12
      $region11: #{tpu_custom_call.1} parent=5 // pred_region
        %s136 = ssub.s32 %s12, 1
        // Predicated region
        $region13: #{tpu_custom_call.1} parent=11 // pred_check
          %p137 = pneg %p73
        $region14: #{tpu_custom_call.1} parent=11 // pred_check_branch
          %139 = sbr.rel (%p137) target = $region16
        $region15: #{tpu_custom_call.1} parent=11 // pred_region
          _
        $region16: #{tpu_custom_call.1} parent=11 // pred_fallthru
          _
        // Predicated region
        $region17: #{tpu_custom_call.1} parent=11 // pred_check
          %p140 = pneg %p94
        $region18: #{tpu_custom_call.1} parent=11 // pred_check_branch
          %142 = sbr.rel (%p140) target = $region20
        $region19: #{tpu_custom_call.1} parent=11 // pred_region
          _
        $region20: #{tpu_custom_call.1} parent=11 // pred_fallthru
          _
      $region12: #{tpu_custom_call.1} parent=5 // pred_fallthru
        _
      %p143 = scmp.lt.s32.totalorder %s12, 2
      // Predicated region
      $region21: #{tpu_custom_call.1} parent=5 // pred_check
        %p144 = pneg %p143
      $region22: #{tpu_custom_call.1} parent=5 // pred_check_branch
        %146 = sbr.rel (%p144) target = $region24
      $region23: #{tpu_custom_call.1} parent=5 // pred_region
        // Predicated region
        $region25: #{tpu_custom_call.1} parent=23 // pred_check
          %p147 = pneg %p46
        $region26: #{tpu_custom_call.1} parent=23 // pred_check_branch
          %149 = sbr.rel (%p147) target = $region28
        $region27: #{tpu_custom_call.1} parent=23 // pred_region
          %s150 = smul.u32 2, %s20
          %p151 = scmp.lt.s32.totalorder %s19, 1
          %s152 = scalar_select %p151, %s19, 1
          %p153 = scmp.lt.s32.totalorder %s150, 1
          %s154 = scalar_select %p153, %s150, 1
          %s155 = smul.addr %s152, 2
          %s156 = sadd.s32 %s154, %s155
          %s157 = smul.addr %s156, 4
          %s158 = scalar_lea.vmem %s0, %s157
          %s159 = smul.u32 2, %s20
        $region28: #{tpu_custom_call.1} parent=23 // pred_fallthru
          _
      $region24: #{tpu_custom_call.1} parent=5 // pred_fallthru
        _
      %p160 = scmp.le.s32.totalorder 1, %s12
      %p161 = scmp.lt.s32.totalorder %s12, 3
      %p162 = pnand %p160, %p161
      %p163 = pneg %p162
      // Predicated region
      $region29: #{tpu_custom_call.1} parent=5 // pred_check
        _
      $region30: #{tpu_custom_call.1} parent=5 // pred_check_branch
        %165 = sbr.rel (%p162) target = $region32
      $region31: #{tpu_custom_call.1} parent=5 // pred_region
        %s166 = ssub.s32 %s12, 1
        %s167 = smul.u32 2, %s22
        %p168 = scmp.lt.s32.totalorder %s21, 1
        %s169 = scalar_select %p168, %s21, 1
        %p170 = scmp.lt.s32.totalorder %s167, 1
        %s171 = scalar_select %p170, %s167, 1
        %s172 = smul.addr %s169, 2
        %s173 = sadd.s32 %s171, %s172
        %s174 = smul.addr %s173, 4
        %s175 = scalar_lea.vmem %s0, %s174
        %p176 = pneg %p52
        %p177 = pneg %p49
        %p178 = pneg %p73
        %p179 = pneg %p70
        %p180 = pneg %p94
        %p181 = pneg %p91
        %p182 = pneg %p122
        %p183 = pneg %p119
        %s184 = sand.u32 %s109, 1
        %s185 = scalar_lea.sflag [#allocation3], %s184
        %s186 = sand.u32 %s109, 1
        %s187 = smul.addr %s186, 32
        %s188 = scalar_lea.vmem [#allocation2], %s187
        %s189 = smul.u32 2, %s22
        %p190 = scmp.lt.s32.totalorder %s21, 1
        %s191 = scalar_select %p190, %s21, 1
        %p192 = scmp.lt.s32.totalorder %s189, 1
        %s193 = scalar_select %p192, %s189, 1
        %s194 = smul.addr %s191, 2
        %s195 = sadd.s32 %s193, %s194
        %s196 = smul.addr %s195, 4
        %s197 = scalar_lea.vmem %s0, %s196
        %s198 = smul.u32 2, %s22
        %s199 = smul.u32 2, %s22
        %v201 = vld [vmem:[%s197] sm:$0xff]
        %v203 = vcombine.high %v201, %v201
        %v205 = vpack.c.bf16 %v201, %v201
        %v206 = vpack.c.bf16 %v203, %v203
        %v207 = vld [vmem:[%s1] sm:$0xf]
        %v208 = vld [vmem:[%s1 + $0x4] sm:$0xf]
        %v209 = vld [vmem:[%s1 + $0x8] sm:$0xf]
        %v210 = vld [vmem:[%s1 + $0xc] sm:$0xf]
        %v211 = vld [vmem:[%s2] sm:$0xff]
        %v212 = vld [vmem:[%s2 + $0x8] sm:$0xff]
        %v213 = vld [vmem:[%s2 + $0x10] sm:$0xff]
        %v214 = vld [vmem:[%s2 + $0x18] sm:$0xff]
        %216 = vset.pattern.permute.xlu0 0
        %217 = vperm.xlu0 %216, %v211
        %v218 = vpop.permute.xlu0 %217
        %221 = vset.pattern.permute.xlu0 0
        %222 = vperm.xlu0 %221, %v212
        %v223 = vpop.permute.xlu0 %222
        %226 = vset.pattern.permute.xlu0 0
        %227 = vperm.xlu0 %226, %v213
        %v228 = vpop.permute.xlu0 %227
        %231 = vset.pattern.permute.xlu0 0
        %232 = vperm.xlu0 %231, %v214
        %v233 = vpop.permute.xlu0 %232
        %v239 = vunpack.c.l.b16 %v207
        %v240 = vunpack.c.l.b16 %v208
        %v241 = vunpack.c.l.b16 %v209
        %v242 = vunpack.c.l.b16 %v210
        %v243 = vpack.c.b16 %v240, %v239
        %v244 = vpack.c.b16 %v242, %v241
        %vm245 = vcmask 31744
        %v247 = vsel %vm245, %v243, 0
        %v250 = vsel %vm245, %v244, 0
        %vm252 = vcmask 1041408
        %v254 = vsel %vm252, %v205, 0
        %v257 = vsel %vm252, %v206, 0
        %259 = vmatprep.subr.bf16.mxu0 %v257
        %260 = vmatpush1.bf16.msra.mxu0 %v254
        %261 = vmatprep.subr.bf16.mxu0 0
        %262 = vmatpush1.bf16.msra.mxu0 0
        %263 = vmatprep.subr.bf16.mxu0 0
        %264 = vmatpush1.bf16.msra.mxu0 0
        %265 = vmatprep.subr.bf16.mxu0 0
        %266 = vmatpush1.bf16.msra.mxu0 0
        %267 = vmatprep.subr.bf16.mxu0 0
        %268 = vmatpush1.bf16.msra.mxu0 0
        %269 = vmatprep.subr.bf16.mxu0 0
        %270 = vmatpush1.bf16.msra.mxu0 0
        %271 = vmatprep.subr.bf16.mxu0 0
        %272 = vmatpush1.bf16.msra.mxu0 0
        %273 = vmatprep.subr.bf16.mxu0 0
        %274 = vmatpush1.bf16.msra.mxu0 0
        %275 = vmatprep.subr.bf16.mxu0 0
        %276 = vmatpush1.bf16.msra.mxu0 0
        %277 = vmatprep.subr.bf16.mxu0 0
        %278 = vmatpush1.bf16.msra.mxu0 0
        %279 = vmatprep.subr.bf16.mxu0 0
        %280 = vmatpush1.bf16.msra.mxu0 0
        %281 = vmatprep.subr.bf16.mxu0 0
        %282 = vmatpush1.bf16.msra.mxu0 0
        %283 = vmatprep.subr.bf16.mxu0 0
        %284 = vmatpush1.bf16.msra.mxu0 0
        %285 = vmatprep.subr.bf16.mxu0 0
        %286 = vmatpush1.bf16.msra.mxu0 0
        %287 = vmatprep.subr.bf16.mxu0 0
        %288 = vmatpush1.bf16.msra.mxu0 0
        %289 = vmatprep.subr.bf16.mxu0 0
        %290 = vmatpush1.bf16.msra.mxu0 0
        %291 = vmatprep.mubr.bf16.mxu0 0
        %292 = vmatmul.mubr.bf16.gmra.mrb[0].mxu0 %v247
        %v293 = vpop.f32.mrb[0].mxu0
        %v294 = vadd.f32 %v218, %v293
        %v295 = vpop.f32.mrb[0].mxu0
        %v296 = vadd.f32 %v218, %v295
        %v297 = vpop.f32.mrb[0].mxu0
        %v298 = vadd.f32 %v223, %v297
        %v299 = vpop.f32.mrb[0].mxu0
        %v300 = vadd.f32 %v223, %v299
        %301 = vmatprep.mubr.bf16.mxu0 0
        %302 = vmatmul.mubr.bf16.gmra.mrb[0].mxu0 %v250
        %v303 = vpop.f32.mrb[0].mxu0
        %v304 = vadd.f32 %v228, %v303
        %v305 = vpop.f32.mrb[0].mxu0
        %v306 = vadd.f32 %v228, %v305
        %v307 = vpop.f32.mrb[0].mxu0
        %v308 = vadd.f32 %v233, %v307
        %v309 = vpop.f32.mrb[0].mxu0
        %v310 = vadd.f32 %v233, %v309
        %311 = vdwg.mxu0
        %v312 = vpack.c.bf16 %v298, %v294
        %v313 = vpack.c.bf16 %v300, %v296
        %v314 = vpack.c.bf16 %v308, %v304
        %v315 = vpack.c.bf16 %v310, %v306
        %v320 = vunpack.c.l.b16 %v312
        %v321 = vunpack.c.l.b16 %v313
        %v322 = vunpack.c.h.b16 %v312
        %v323 = vunpack.c.h.b16 %v313
        %v324 = vunpack.c.l.b16 %v314
        %v325 = vunpack.c.l.b16 %v315
        %v326 = vunpack.c.h.b16 %v314
        %v327 = vunpack.c.h.b16 %v315
        %v328 = vpack.c.b16 %v321, %v320
        %v329 = vpack.c.b16 %v323, %v322
        %v330 = vpack.c.b16 %v325, %v324
        %v331 = vpack.c.b16 %v327, %v326
        %336 = vst [vmem:[%s188] sm:$0xff] %v328
        %337 = vst [vmem:[%s188 + $0x8] sm:$0xff] %v329
        %338 = vst [vmem:[%s188 + $0x10] sm:$0xff] %v330
        %339 = vst [vmem:[%s188 + $0x18] sm:$0xff] %v331
        %s340 = sand.u32 %s109, 1
        %s341 = scalar_lea.sflag [#allocation3], %s340
        %s342 = sand.u32 %s109, 1
        %s343 = smul.addr %s342, 32
        %s344 = scalar_lea.vmem [#allocation2], %s343
        // Predicated region
        $region33: #{tpu_custom_call.1} parent=31 // pred_check
          %p345 = pneg %p119
        $region34: #{tpu_custom_call.1} parent=31 // pred_check_branch
          %347 = sbr.rel (%p345) target = $region36
        $region35: #{tpu_custom_call.1} parent=31 // pred_region
          %s348 = smul.u32 2, %s22
          %s350 = ssub.s32 512, 512
          %351 = vsyncadd %s341, %s350
          %s352 = smul.addr %s21, 8
          %s353 = sadd.s32 %s348, %s352
          %s354 = smul.addr %s353, 64
          %s355 = scalar_lea.hbm %s3, %s354
          %s356 = sshll.u32 %s344, 4
          %s357 = int_to_ptr.vmem [resolvable:$true] %s356
          %362 = dma.vmem_to_hbm [thread:$0]  %s357, 512, %s355, %s341, 128, 128, 8
        $region36: #{tpu_custom_call.1} parent=31 // pred_fallthru
          _
      $region32: #{tpu_custom_call.1} parent=5 // pred_fallthru
        _
      %p363 = scmp.le.s32.totalorder 2, %s12
      // Predicated region
      $region37: #{tpu_custom_call.1} parent=5 // pred_check
        %p364 = pneg %p363
      $region38: #{tpu_custom_call.1} parent=5 // pred_check_branch
        %366 = sbr.rel (%p364) target = $region40
      $region39: #{tpu_custom_call.1} parent=5 // pred_region
        %s367 = ssub.s32 %s12, 2
        // Predicated region
        $region41: #{tpu_custom_call.1} parent=39 // pred_check
          %p368 = pneg %p125
        $region42: #{tpu_custom_call.1} parent=39 // pred_check_branch
          %370 = sbr.rel (%p368) target = $region44
        $region43: #{tpu_custom_call.1} parent=39 // pred_region
          %s371 = sand.u32 %s110, 1
          %s372 = scalar_lea.sflag [#allocation3], %s371
          %s373 = sand.u32 %s110, 1
          %s374 = smul.addr %s373, 32
          %s375 = scalar_lea.vmem [#allocation2], %s374
          %376 = dma.done %s372, 512
        $region44: #{tpu_custom_call.1} parent=39 // pred_fallthru
          _
      $region40: #{tpu_custom_call.1} parent=5 // pred_fallthru
        _
    $region6: #{tpu_custom_call.1} parent=1 // loop_footer
      %s16 = sadd.s32 1, %s12
    $region7: #{tpu_custom_call.1} parent=1 // loop_footer_branch
      %11 = sbr.rel target = $region3
    $region8: #{tpu_custom_call.1} parent=1 // loop_exit
      _
    %377 = vsyncpa [#allocation3], 1
    %s378 = scalar_lea.sflag [#allocation3], 1
    %379 = vsyncpa %s378, 1

</llo_original>
